<compile_context>
chip_gen: v6e
topology: v6e:2x2x1
jax: 0.10.0
libtpu: 0.0.40
codegen_flags: <defaults>
</compile_context>

<pallas_src>
import jax
import jax.numpy as jnp
from jax.experimental import pallas as pl
from jax.experimental.pallas import tpu as pltpu


# ------------------------------ Pallas kernel --------------------------------

def make_gcn_kernel(tb):
    """One grid step processes `tb` batch elements.  Per element: a single MXU
    matmul G[(o,q),(c,n)] @ x[(c,n),t] (bf16 operands, f32 accumulate), an f32
    bias add, one cast, one contiguous store.  No relayouts, no scratch."""

    def kernel(g_ref, b_ref, x_ref, o_ref):
        g = g_ref[...]          # [c_out*N, c_in*N] bf16 (resident across steps)
        b = b_ref[...]          # [c_out*N, 1]      f32  (resident across steps)
        # tb is a small static constant (<= 8); the per-element matmuls are
        # independent, so a short unrolled Python loop is fine.
        for i in range(tb):
            x_i = x_ref[i].astype(jnp.bfloat16)                   # [c_in*N, T]
            acc = jnp.dot(g, x_i, preferred_element_type=jnp.float32)
            o_ref[i] = (acc + b).astype(o_ref.dtype)              # [c_out*N, T]

    return kernel


# ------------------------------ glue / wrapper -------------------------------

def cheby_polynomials(adj, K):
    """Stack [K, N, N] of Chebyshev polynomials T_k(adj) (untransposed)."""
    N = adj.shape[0]
    L0 = jnp.eye(N, dtype=adj.dtype)
    L1 = adj
    Ls = [L0, L1]
    for _ in range(2, K):
        L2 = 2.0 * (adj @ L1) - L0
        L0, L1 = L1, L2
        Ls.append(L2)
    return jnp.stack(Ls[:K], axis=0)


def _pick_batch_tile(B):
    """Batch elements per grid step: a divisor of B, <= 8, and <= B//2 when
    B >= 2 so v7x's two TensorCores both get grid steps (review items 3/4)."""
    tb = min(8, B)
    if B >= 2:
        tb = min(tb, B // 2)
    tb = max(tb, 1)
    while B % tb:
        tb -= 1
    return tb


def cheby_conv_forward(x, adj, W, bias, K, out_dtype=jnp.bfloat16):
    """x: [B, c_in, N, T], adj: [N, N],
       W: [c_out, K*c_in] with PyTorch Conv2d column order m = c*K + k (c-major),
       bias: [c_out]."""
    B, c_in, N, T = x.shape
    c_out = W.shape[0]

    # ---- x-independent operator prep (tiny JAX glue, once per call) ---------
    # T_k(adj) recursion in f32, then fold the 1x1-conv weights over k:
    #   G[(o,q),(c,n)] = sum_k W[o, c*K + k] * T_k(adj)[q, n]
    L_stack = cheby_polynomials(adj.astype(jnp.float32), K)        # [K, N, N]
    Wk = W.astype(jnp.float32).reshape(c_out, c_in, K)             # m = c*K + k
    G = jnp.einsum("ock,kqn->oqcn", Wk, L_stack)                   # [c_out,N,c_in,N]
    G = G.reshape(c_out * N, c_in * N).astype(jnp.bfloat16)
    # Bias expanded to the (o, q) row layout of the kernel output (f32 add).
    b2 = jnp.repeat(bias.astype(jnp.float32), N).reshape(c_out * N, 1)

    # Native x layout: pure-metadata reshape, no transpose, no extra HBM pass.
    x_flat = x.reshape(B, c_in * N, T)

    tb = _pick_batch_tile(B)
    kernel = make_gcn_kernel(tb)

    out_flat = pl.pallas_call(
        kernel,
        out_shape=jax.ShapeDtypeStruct((B, c_out * N, T), out_dtype),
        grid=(B // tb,),
        in_specs=[
            pl.BlockSpec((c_out * N, c_in * N), lambda i: (0, 0)),  # G, resident
            pl.BlockSpec((c_out * N, 1), lambda i: (0, 0)),         # bias, resident
            pl.BlockSpec((tb, c_in * N, T), lambda i: (i, 0, 0)),   # x per step
        ],
        out_specs=pl.BlockSpec((tb, c_out * N, T), lambda i: (i, 0, 0)),
        compiler_params=pltpu.CompilerParams(
            # 2-way (or more) parallel over batch steps -> both v7x TensorCores
            # get work; a no-op on single-TC v5e/v6e.
            dimension_semantics=("parallel",),
            # Per-step usage is ~0.2 MB; 32 MiB leaves ample headroom on every
            # generation (v7x physical VMEM is only 64 MiB).
            vmem_limit_bytes=32 * 1024 * 1024,
        ),
    )(G, b2, x_flat)

    return out_flat.reshape(B, c_out, N, T)


# -------------------------------- reference ----------------------------------

def cheby_conv_reference(x, adj, W, bias, K):
    """Pure-JAX f32 mirror of the PyTorch forward (for verification)."""
    B, c_in, N, T = x.shape
    c_out = W.shape[0]
    L_stack = cheby_polynomials(adj, K)                 # [K, N, N]
    Lap = jnp.transpose(L_stack, (0, 2, 1))             # torch .transpose(-1,-2)
    y = jnp.einsum("bcnl,knq->bckql", x, Lap)           # [B, c_in, K, N, T]
    y = y.reshape(B, c_in * K, N, T)                    # m = c*K + k
    out = jnp.einsum("om,bmnl->bonl", W, y) + bias[None, :, None, None]
    return out


# ----------------------------------- main ------------------------------------

if __name__ == "__main__":
    B, c_in, c_out, N, T, K = 2, 4, 8, 16, 32, 3

    key = jax.random.PRNGKey(0)
    kx, ka, kw, kb = jax.random.split(key, 4)

    x = jax.random.normal(kx, (B, c_in, N, T), dtype=jnp.float32)
    A = jax.random.normal(ka, (N, N), dtype=jnp.float32)
    adj = (A + A.T) / (2.0 * N)                          # small symmetric "laplacian"

    # Conv2d(K*c_in, c_out, kernel_size=1, bias=True) parameters, PyTorch
    # in-channel order m = c*K + k (c-major), deterministic.
    W = jax.random.normal(kw, (c_out, K * c_in), dtype=jnp.float32) * 0.1
    bias = jax.random.normal(kb, (c_out,), dtype=jnp.float32) * 0.1

    out = cheby_conv_forward(x, adj, W, bias, K)         # bf16 output (item 6)
    out = jax.block_until_ready(out)

    ref = cheby_conv_reference(x, adj, W, bias, K)
    assert out.shape == (B, c_out, N, T)
    max_err = float(jnp.max(jnp.abs(out.astype(jnp.float32) - ref)))
    # bf16 MXU operands + bf16 output with f32 accumulation/bias: 3e-2 budget.
    assert jnp.allclose(out.astype(jnp.float32), ref, rtol=3e-2, atol=3e-2), max_err

    print("KERNEL_OK")
</pallas_src>

<mosaic_0001>
module attributes {stable_mosaic.version = 11 : i64} {
  func.func @kernel(%arg0: i32, %arg1: memref<128x64xbf16, #tpu.memory_space<vmem>>, %arg2: memref<128x1xf32, #tpu.memory_space<vmem>>, %arg3: memref<1x64x32xf32, #tpu.memory_space<vmem>>, %arg4: memref<1x128x32xbf16, #tpu.memory_space<vmem>>) attributes {dimension_semantics = [#tpu.dimension_semantics<parallel>], iteration_bounds = array<i64: 2>, scalar_prefetch = 0 : i64, scratch_operands = 0 : i64, tpu.core_type = #tpu.core_type<tc>, window_params = [{pipeline_mode = #tpu.pipeline_mode<synchronous>, transform_indices = @transform_0, window_bounds = array<i64: 128, 64>}, {pipeline_mode = #tpu.pipeline_mode<synchronous>, transform_indices = @transform_1, window_bounds = array<i64: 128, 1>}, {transform_indices = @transform_2, window_bounds = array<i64: 1, 64, 32>}, {transform_indices = @transform_3, window_bounds = array<i64: 1, 128, 32>}]} {
    %c0 = arith.constant 0 : index
    %c0_0 = arith.constant 0 : index
    %0 = vector.load %arg1[%c0, %c0_0] : memref<128x64xbf16, #tpu.memory_space<vmem>>, vector<128x64xbf16>
    %c0_1 = arith.constant 0 : index
    %c0_2 = arith.constant 0 : index
    %1 = vector.load %arg2[%c0_1, %c0_2] : memref<128x1xf32, #tpu.memory_space<vmem>>, vector<128x1xf32>
    %c0_3 = arith.constant 0 : index
    %c0_4 = arith.constant 0 : index
    %c0_5 = arith.constant 0 : index
    %2 = vector.load %arg3[%c0_3, %c0_4, %c0_5] : memref<1x64x32xf32, #tpu.memory_space<vmem>>, vector<1x64x32xf32>
    %3 = vector.shape_cast %2 : vector<1x64x32xf32> to vector<64x32xf32>
    %4 = arith.truncf %3 : vector<64x32xf32> to vector<64x32xbf16>
    %cst = arith.constant dense<0.000000e+00> : vector<128x32xf32>
    %5 = tpu.matmul %0, %4, %cst {dimension_numbers = #tpu.dot_dimension_numbers<[1], [0], [0], [1], [0, 0, 1, 1], [], []>} : vector<128x64xbf16>, vector<64x32xbf16>, vector<128x32xf32> -> vector<128x32xf32>
    %6 = vector.broadcast %1 : vector<128x1xf32> to vector<128x32xf32>
    %7 = arith.addf %5, %6 : vector<128x32xf32>
    %8 = arith.truncf %7 : vector<128x32xf32> to vector<128x32xbf16>
    %c0_6 = arith.constant 0 : index
    %c0_7 = arith.constant 0 : index
    %c0_8 = arith.constant 0 : index
    %9 = vector.load %arg4[%c0_6, %c0_7, %c0_8] : memref<1x128x32xbf16, #tpu.memory_space<vmem>>, vector<1x128x32xbf16>
    %10 = vector.shape_cast %9 : vector<1x128x32xbf16> to vector<128x32xbf16>
    %11 = vector.shape_cast %8 : vector<128x32xbf16> to vector<1x128x32xbf16>
    tpu.vector_store %arg4[%c0_6, %c0_7, %c0_8], %11 {strides = array<i32>} : memref<1x128x32xbf16, #tpu.memory_space<vmem>>, vector<1x128x32xbf16>,
    return
  }
  func.func @transform_0(%arg0: i32) -> (i32, i32) {
    %c0_i32 = arith.constant 0 : i32
    %c0_i32_0 = arith.constant 0 : i32
    %c0_i32_1 = arith.constant 0 : i32
    return %c0_i32, %c0_i32_0 : i32, i32
  }
  func.func @transform_1(%arg0: i32) -> (i32, i32) {
    %c0_i32 = arith.constant 0 : i32
    %c0_i32_0 = arith.constant 0 : i32
    %c0_i32_1 = arith.constant 0 : i32
    return %c0_i32, %c0_i32_0 : i32, i32
  }
  func.func @transform_2(%arg0: i32) -> (i32, i32, i32) {
    %c0_i32 = arith.constant 0 : i32
    %c0_i32_0 = arith.constant 0 : i32
    %c0_i32_1 = arith.constant 0 : i32
    return %arg0, %c0_i32, %c0_i32_0 : i32, i32, i32
  }
  func.func @transform_3(%arg0: i32) -> (i32, i32, i32) {
    %c0_i32 = arith.constant 0 : i32
    %c0_i32_0 = arith.constant 0 : i32
    %c0_i32_1 = arith.constant 0 : i32
    return %arg0, %c0_i32, %c0_i32_0 : i32, i32, i32
  }
}

</mosaic_0001>

<llo_original>
// kernel: tpu_custom_call.1
$region0: #{tpu_custom_call.1}
  #allocation0 [shape = 'u32[]', space=smem, size = 0x4, offset = 0x4, fixed_abs, tag = 'smem constant byte address 0x4 - core index']
  #allocation1 [shape = 'u32[144,128]{1,0:T(1,128)}', space=vmem, size = 0x12000, scoped, tag = 'internal scratch']
  %s0 = inlined_call_operand.vmem [shape: bf16[128,64], index: 0, kind: input, shape index: {}]
  %s1 = inlined_call_operand.vmem [shape: f32[128,1], index: 1, kind: input, shape index: {}]
  %s2 = inlined_call_operand.vmem [shape: f32[2,64,32], index: 2, kind: input, shape index: {}]
  %s3 = inlined_call_operand.vmem [shape: bf16[2,128,32], index: 3, kind: output, shape index: {}]
  %s4 = sld [smem:[#allocation0]]
  $region45: #{tpu_custom_call.1} parent=0
    _
  %s6 = ssub.s32 1, %s4
  %s7 = scalar_select 0, %s6, %s4
  loop: start=0, step=1, limit=4
  $region2: #{tpu_custom_call.1} parent=0 // loop_pre_header
    _
  $region3: #{tpu_custom_call.1} parent=0 // loop_header
    %s9 = sphi 0, %s13
    %p10 = scmp.ge.s32.totalorder %s9, 4
    %s17 = sphi 0, %s17
    %s19 = sphi 0, %s17
    %s20 = sphi 0, %s19
    %s34 = sphi 0, %s20
    %s38 = sphi 0, %s38
    %s40 = sphi 0, %s38
    %s41 = sphi 0, %s40
    %s55 = sphi 0, %s41
    %s61 = sphi 0, %s63
    %s64 = sphi 0, %s61
    %s65 = sphi 0, %s64
    %s81 = sphi 0, %s65
    %s87 = sphi 0, %s89
    %s90 = sphi 0, %s87
    %s91 = sphi 0, %s90
    %s107 = sphi 0, %s91
  $region4: #{tpu_custom_call.1} parent=0 // loop_header_branch
    %12 = sbr.rel (%p10) target = $region8
  $region5: #{tpu_custom_call.1} parent=0 // loop_body
    %s14 = ssub.s32 %s9, 1
    %s15 = ssub.s32 %s9, 2
    %s16 = sadd.s32 %s9, 1
    %s18 = sadd.s32 %s17, 1
    %p21 = scmp.eq.s32.totalorder %s9, 1
    %p22 = scmp.ne.s32.totalorder %s17, %s19
    %p23 = scmp.eq.s32.totalorder %s9, 0
    %p24 = por %p22, %p23
    %p25 = scmp.ne.s32.totalorder %s17, %s19
    %p26 = scmp.eq.s32.totalorder %s14, 1
    %p27 = por %p25, %p26
    %p28 = scmp.ne.s32.totalorder %s19, %s20
    %p29 = scmp.eq.s32.totalorder %s14, 0
    %p30 = por %p28, %p29
    %p31 = scmp.ne.s32.totalorder %s19, %s20
    %p32 = scmp.eq.s32.totalorder %s15, 1
    %p33 = por %p31, %p32
    %p35 = scmp.ne.s32.totalorder %s20, %s34
    %p36 = scmp.eq.s32.totalorder %s15, 0
    %p37 = por %p35, %p36
    %s39 = sadd.s32 %s38, 1
    %p42 = scmp.eq.s32.totalorder %s9, 1
    %p43 = scmp.ne.s32.totalorder %s38, %s40
    %p44 = scmp.eq.s32.totalorder %s9, 0
    %p45 = por %p43, %p44
    %p46 = scmp.ne.s32.totalorder %s38, %s40
    %p47 = scmp.eq.s32.totalorder %s14, 1
    %p48 = por %p46, %p47
    %p49 = scmp.ne.s32.totalorder %s40, %s41
    %p50 = scmp.eq.s32.totalorder %s14, 0
    %p51 = por %p49, %p50
    %p52 = scmp.ne.s32.totalorder %s40, %s41
    %p53 = scmp.eq.s32.totalorder %s15, 1
    %p54 = por %p52, %p53
    %p56 = scmp.ne.s32.totalorder %s41, %s55
    %p57 = scmp.eq.s32.totalorder %s15, 0
    %p58 = por %p56, %p57
    %s59 = ssub.s32 %s9, %s16
    %p60 = scmp.eq.s32.totalorder %s59, 0
    %s62 = sadd.s32 %s61, 1
    %s63 = scalar_select %p60, %s61, %s62
    %p66 = pneg %p60
    %p67 = scmp.eq.s32.totalorder %s9, 1
    %p68 = por %p66, %p67
    %p69 = scmp.ne.s32.totalorder %s61, %s64
    %p70 = scmp.eq.s32.totalorder %s9, 0
    %p71 = por %p69, %p70
    %p72 = scmp.ne.s32.totalorder %s61, %s64
    %p73 = scmp.eq.s32.totalorder %s14, 1
    %p74 = por %p72, %p73
    %p75 = scmp.ne.s32.totalorder %s64, %s65
    %p76 = scmp.eq.s32.totalorder %s14, 0
    %p77 = por %p75, %p76
    %p78 = scmp.ne.s32.totalorder %s64, %s65
    %p79 = scmp.eq.s32.totalorder %s15, 1
    %p80 = por %p78, %p79
    %p82 = scmp.ne.s32.totalorder %s65, %s81
    %p83 = scmp.eq.s32.totalorder %s15, 0
    %p84 = por %p82, %p83
    %s85 = ssub.s32 %s9, %s16
    %p86 = scmp.eq.s32.totalorder %s85, 0
    %s88 = sadd.s32 %s87, 1
    %s89 = scalar_select %p86, %s87, %s88
    %p92 = pneg %p86
    %p93 = scmp.eq.s32.totalorder %s9, 1
    %p94 = por %p92, %p93
    %p95 = scmp.ne.s32.totalorder %s87, %s90
    %p96 = scmp.eq.s32.totalorder %s9, 0
    %p97 = por %p95, %p96
    %p98 = scmp.ne.s32.totalorder %s87, %s90
    %p99 = scmp.eq.s32.totalorder %s14, 1
    %p100 = por %p98, %p99
    %p101 = scmp.ne.s32.totalorder %s90, %s91
    %p102 = scmp.eq.s32.totalorder %s14, 0
    %p103 = por %p101, %p102
    %p104 = scmp.ne.s32.totalorder %s90, %s91
    %p105 = scmp.eq.s32.totalorder %s15, 1
    %p106 = por %p104, %p105
    %p108 = scmp.ne.s32.totalorder %s91, %s107
    %p109 = scmp.eq.s32.totalorder %s15, 0
    %p110 = por %p108, %p109
    %p111 = scmp.le.s32.totalorder 1, %s9
    %p112 = scmp.lt.s32.totalorder %s9, 3
    %p113 = pnand %p111, %p112
    %p114 = pneg %p113
    // Predicated region
    $region9: #{tpu_custom_call.1} parent=5 // pred_check
      _
    $region10: #{tpu_custom_call.1} parent=5 // pred_check_branch
      %116 = sbr.rel (%p113) target = $region12
    $region11: #{tpu_custom_call.1} parent=5 // pred_region
      %s117 = ssub.s32 %s9, 1
      // Predicated region
      $region13: #{tpu_custom_call.1} parent=11 // pred_check
        %p118 = pneg %p30
      $region14: #{tpu_custom_call.1} parent=11 // pred_check_branch
        %120 = sbr.rel (%p118) target = $region16
      $region15: #{tpu_custom_call.1} parent=11 // pred_region
        _
      $region16: #{tpu_custom_call.1} parent=11 // pred_fallthru
        _
      // Predicated region
      $region17: #{tpu_custom_call.1} parent=11 // pred_check
        %p121 = pneg %p51
      $region18: #{tpu_custom_call.1} parent=11 // pred_check_branch
        %123 = sbr.rel (%p121) target = $region20
      $region19: #{tpu_custom_call.1} parent=11 // pred_region
        _
      $region20: #{tpu_custom_call.1} parent=11 // pred_fallthru
        _
    $region12: #{tpu_custom_call.1} parent=5 // pred_fallthru
      _
    %p124 = scmp.lt.s32.totalorder %s9, 2
    // Predicated region
    $region21: #{tpu_custom_call.1} parent=5 // pred_check
      %p125 = pneg %p124
    $region22: #{tpu_custom_call.1} parent=5 // pred_check_branch
      %127 = sbr.rel (%p125) target = $region24
    $region23: #{tpu_custom_call.1} parent=5 // pred_region
      // Predicated region
      $region25: #{tpu_custom_call.1} parent=23 // pred_check
        %p128 = pneg %p71
      $region26: #{tpu_custom_call.1} parent=23 // pred_check_branch
        %130 = sbr.rel (%p128) target = $region28
      $region27: #{tpu_custom_call.1} parent=23 // pred_region
        %p131 = scmp.lt.s32.totalorder %s9, 1
        %s132 = scalar_select %p131, %s9, 1
        %s133 = smul.addr %s132, 8
        %s134 = smul.addr %s133, 8
        %s135 = scalar_lea.vmem %s2, %s134
      $region28: #{tpu_custom_call.1} parent=23 // pred_fallthru
        _
    $region24: #{tpu_custom_call.1} parent=5 // pred_fallthru
      _
    %p136 = scmp.le.s32.totalorder 1, %s9
    %p137 = scmp.lt.s32.totalorder %s9, 3
    %p138 = pnand %p136, %p137
    %p139 = pneg %p138
    // Predicated region
    $region29: #{tpu_custom_call.1} parent=5 // pred_check
      _
    $region30: #{tpu_custom_call.1} parent=5 // pred_check_branch
      %141 = sbr.rel (%p138) target = $region32
    $region31: #{tpu_custom_call.1} parent=5 // pred_region
      %s142 = ssub.s32 %s9, 1
      %p143 = pneg %p30
      %p144 = pneg %p27
      %p145 = pneg %p51
      %p146 = pneg %p48
      %p147 = scmp.lt.s32.totalorder %s14, 1
      %s148 = scalar_select %p147, %s14, 1
      %s149 = smul.addr %s148, 8
      %s150 = smul.addr %s149, 8
      %s151 = scalar_lea.vmem %s2, %s150
      %p152 = pneg %p77
      %p153 = pneg %p74
      %p154 = pneg %p103
      %p155 = pneg %p100
      %p156 = scmp.lt.s32.totalorder %s14, 1
      %s157 = scalar_select %p156, %s14, 1
      %s158 = smul.addr %s157, 16
      %s159 = smul.addr %s158, 4
      %s160 = scalar_lea.vmem %s3, %s159
      %p161 = scmp.lt.s32.totalorder %s14, 1
      %s162 = scalar_select %p161, %s14, 1
      %s163 = smul.addr %s162, 8
      %s164 = smul.addr %s163, 8
      %s165 = scalar_lea.vmem %s2, %s164
      %p166 = scmp.lt.s32.totalorder %s14, 1
      %s167 = scalar_select %p166, %s14, 1
      %s168 = smul.addr %s167, 16
      %s169 = smul.addr %s168, 4
      %s170 = scalar_lea.vmem %s3, %s169
      %v172 = vld [vmem:[%s0] sm:$0xf]
      %v173 = vld [vmem:[%s0 + $0x4] sm:$0xf]
      %v174 = vld [vmem:[%s0 + $0x8] sm:$0xf]
      %v175 = vld [vmem:[%s0 + $0xc] sm:$0xf]
      %v176 = vld [vmem:[%s0 + $0x10] sm:$0xf]
      %v177 = vld [vmem:[%s0 + $0x14] sm:$0xf]
      %v178 = vld [vmem:[%s0 + $0x18] sm:$0xf]
      %v179 = vld [vmem:[%s0 + $0x1c] sm:$0xf]
      %v180 = vld [vmem:[%s0 + $0x20] sm:$0xf]
      %v181 = vld [vmem:[%s0 + $0x24] sm:$0xf]
      %v182 = vld [vmem:[%s0 + $0x28] sm:$0xf]
      %v183 = vld [vmem:[%s0 + $0x2c] sm:$0xf]
      %v184 = vld [vmem:[%s0 + $0x30] sm:$0xf]
      %v185 = vld [vmem:[%s0 + $0x34] sm:$0xf]
      %v186 = vld [vmem:[%s0 + $0x38] sm:$0xf]
      %v187 = vld [vmem:[%s0 + $0x3c] sm:$0xf]
      %v188 = vld [vmem:[%s1] sm:$0xff]
      %v189 = vld [vmem:[%s1 + $0x8] sm:$0xff]
      %v190 = vld [vmem:[%s1 + $0x10] sm:$0xff]
      %v191 = vld [vmem:[%s1 + $0x18] sm:$0xff]
      %v192 = vld [vmem:[%s1 + $0x20] sm:$0xff]
      %v193 = vld [vmem:[%s1 + $0x28] sm:$0xff]
      %v194 = vld [vmem:[%s1 + $0x30] sm:$0xff]
      %v195 = vld [vmem:[%s1 + $0x38] sm:$0xff]
      %v196 = vld [vmem:[%s1 + $0x40] sm:$0xff]
      %v197 = vld [vmem:[%s1 + $0x48] sm:$0xff]
      %v198 = vld [vmem:[%s1 + $0x50] sm:$0xff]
      %v199 = vld [vmem:[%s1 + $0x58] sm:$0xff]
      %v200 = vld [vmem:[%s1 + $0x60] sm:$0xff]
      %v201 = vld [vmem:[%s1 + $0x68] sm:$0xff]
      %v202 = vld [vmem:[%s1 + $0x70] sm:$0xff]
      %v203 = vld [vmem:[%s1 + $0x78] sm:$0xff]
      %v204 = vld [vmem:[%s165] sm:$0xff]
      %v205 = vld [vmem:[%s165 + $0x8] sm:$0xff]
      %v206 = vld [vmem:[%s165 + $0x10] sm:$0xff]
      %v207 = vld [vmem:[%s165 + $0x18] sm:$0xff]
      %v208 = vld [vmem:[%s165 + $0x20] sm:$0xff]
      %v209 = vld [vmem:[%s165 + $0x28] sm:$0xff]
      %v210 = vld [vmem:[%s165 + $0x30] sm:$0xff]
      %v211 = vld [vmem:[%s165 + $0x38] sm:$0xff]
      %v212 = vpack.c.bf16 %v205, %v204
      %v213 = vpack.c.bf16 %v207, %v206
      %v214 = vpack.c.bf16 %v209, %v208
      %v215 = vpack.c.bf16 %v211, %v210
      %217 = vset.pattern.permute.xlu0 0
      %218 = vperm.xlu0 %217, %v188
      %v219 = vpop.permute.xlu0 %218
      %222 = vset.pattern.permute.xlu0 0
      %223 = vperm.xlu0 %222, %v189
      %v224 = vpop.permute.xlu0 %223
      %227 = vset.pattern.permute.xlu0 0
      %228 = vperm.xlu0 %227, %v190
      %v229 = vpop.permute.xlu0 %228
      %232 = vset.pattern.permute.xlu0 0
      %233 = vperm.xlu0 %232, %v191
      %v234 = vpop.permute.xlu0 %233
      %237 = vset.pattern.permute.xlu0 0
      %238 = vperm.xlu0 %237, %v192
      %v239 = vpop.permute.xlu0 %238
      %242 = vset.pattern.permute.xlu0 0
      %243 = vperm.xlu0 %242, %v193
      %v244 = vpop.permute.xlu0 %243
      %247 = vset.pattern.permute.xlu0 0
      %248 = vperm.xlu0 %247, %v194
      %v249 = vpop.permute.xlu0 %248
      %252 = vset.pattern.permute.xlu0 0
      %253 = vperm.xlu0 %252, %v195
      %v254 = vpop.permute.xlu0 %253
      %257 = vset.pattern.permute.xlu0 0
      %258 = vperm.xlu0 %257, %v196
      %v259 = vpop.permute.xlu0 %258
      %262 = vset.pattern.permute.xlu0 0
      %263 = vperm.xlu0 %262, %v197
      %v264 = vpop.permute.xlu0 %263
      %267 = vset.pattern.permute.xlu0 0
      %268 = vperm.xlu0 %267, %v198
      %v269 = vpop.permute.xlu0 %268
      %272 = vset.pattern.permute.xlu0 0
      %273 = vperm.xlu0 %272, %v199
      %v274 = vpop.permute.xlu0 %273
      %277 = vset.pattern.permute.xlu0 0
      %278 = vperm.xlu0 %277, %v200
      %v279 = vpop.permute.xlu0 %278
      %282 = vset.pattern.permute.xlu0 0
      %283 = vperm.xlu0 %282, %v201
      %v284 = vpop.permute.xlu0 %283
      %287 = vset.pattern.permute.xlu0 0
      %288 = vperm.xlu0 %287, %v202
      %v289 = vpop.permute.xlu0 %288
      %292 = vset.pattern.permute.xlu0 0
      %293 = vperm.xlu0 %292, %v203
      %v294 = vpop.permute.xlu0 %293
      %v312 = vunpack.c.l.b16 %v172
      %v313 = vunpack.c.l.b16 %v173
      %v314 = vunpack.c.l.b16 %v174
      %v315 = vunpack.c.l.b16 %v175
      %v316 = vunpack.c.l.b16 %v176
      %v317 = vunpack.c.l.b16 %v177
      %v318 = vunpack.c.l.b16 %v178
      %v319 = vunpack.c.l.b16 %v179
      %v320 = vunpack.c.l.b16 %v180
      %v321 = vunpack.c.l.b16 %v181
      %v322 = vunpack.c.l.b16 %v182
      %v323 = vunpack.c.l.b16 %v183
      %v324 = vunpack.c.l.b16 %v184
      %v325 = vunpack.c.l.b16 %v185
      %v326 = vunpack.c.l.b16 %v186
      %v327 = vunpack.c.l.b16 %v187
      %v328 = vpack.c.b16 %v313, %v312
      %v329 = vpack.c.b16 %v315, %v314
      %v330 = vpack.c.b16 %v317, %v316
      %v331 = vpack.c.b16 %v319, %v318
      %v332 = vpack.c.b16 %v321, %v320
      %v333 = vpack.c.b16 %v323, %v322
      %v334 = vpack.c.b16 %v325, %v324
      %v335 = vpack.c.b16 %v327, %v326
      %vm336 = vcmask 523264
      %v338 = vsel %vm336, %v328, 0
      %v341 = vsel %vm336, %v329, 0
      %v344 = vsel %vm336, %v330, 0
      %v347 = vsel %vm336, %v331, 0
      %v350 = vsel %vm336, %v332, 0
      %v353 = vsel %vm336, %v333, 0
      %v356 = vsel %vm336, %v334, 0
      %v359 = vsel %vm336, %v335, 0
      %361 = vmatprep.subr.bf16.mxu0 0
      %362 = vmatpush1.bf16.msra.mxu0 0
      %363 = vmatprep.subr.bf16.mxu0 0
      %364 = vmatpush1.bf16.msra.mxu0 0
      %365 = vmatprep.subr.bf16.mxu0 0
      %366 = vmatpush1.bf16.msra.mxu0 0
      %367 = vmatprep.subr.bf16.mxu0 0
      %368 = vmatpush1.bf16.msra.mxu0 0
      %369 = vmatprep.subr.bf16.mxu0 0
      %370 = vmatpush1.bf16.msra.mxu0 %v215
      %371 = vmatprep.subr.bf16.mxu0 0
      %372 = vmatpush1.bf16.msra.mxu0 %v214
      %373 = vmatprep.subr.bf16.mxu0 0
      %374 = vmatpush1.bf16.msra.mxu0 %v213
      %375 = vmatprep.subr.bf16.mxu0 0
      %376 = vmatpush1.bf16.msra.mxu0 %v212
      %377 = vmatprep.subr.bf16.mxu0 0
      %378 = vmatpush2.bf16.msra.mxu0 0
      %379 = vmatprep.subr.bf16.mxu0 0
      %380 = vmatpush2.bf16.msra.mxu0 0
      %381 = vmatprep.subr.bf16.mxu0 0
      %382 = vmatpush2.bf16.msra.mxu0 0
      %383 = vmatprep.subr.bf16.mxu0 0
      %384 = vmatpush2.bf16.msra.mxu0 0
      %385 = vmatprep.subr.bf16.mxu0 0
      %386 = vmatpush2.bf16.msra.mxu0 0
      %387 = vmatprep.subr.bf16.mxu0 0
      %388 = vmatpush2.bf16.msra.mxu0 0
      %389 = vmatprep.subr.bf16.mxu0 0
      %390 = vmatpush2.bf16.msra.mxu0 0
      %391 = vmatprep.subr.bf16.mxu0 0
      %392 = vmatpush2.bf16.msra.mxu0 0
      %393 = vmatprep.mubr.bf16.mxu0 0
      %394 = vmatmul.mubr.bf16.gmra.mxu0 %v338
      %v395 = vpop.f32.mrf.mxu0
      %v396 = vadd.f32 %v219, %v395
      %v397 = vpop.f32.mrf.mxu0
      %v398 = vpop.f32.mrf.mxu0
      %v399 = vadd.f32 %v224, %v398
      %v400 = vpop.f32.mrf.mxu0
      %401 = vmatprep.mubr.bf16.mxu0 0
      %402 = vmatmul.mubr.bf16.gmra.mxu0 %v341
      %v403 = vpop.f32.mrf.mxu0
      %v404 = vadd.f32 %v229, %v403
      %v405 = vpop.f32.mrf.mxu0
      %v406 = vpop.f32.mrf.mxu0
      %v407 = vadd.f32 %v234, %v406
      %v408 = vpop.f32.mrf.mxu0
      %409 = vmatprep.mubr.bf16.mxu0 0
      %410 = vmatmul.mubr.bf16.gmra.mxu0 %v344
      %v411 = vpop.f32.mrf.mxu0
      %v412 = vadd.f32 %v239, %v411
      %v413 = vpop.f32.mrf.mxu0
      %v414 = vpop.f32.mrf.mxu0
      %v415 = vadd.f32 %v244, %v414
      %v416 = vpop.f32.mrf.mxu0
      %417 = vmatprep.mubr.bf16.mxu0 0
      %418 = vmatmul.mubr.bf16.gmra.mxu0 %v347
      %v419 = vpop.f32.mrf.mxu0
      %v420 = vadd.f32 %v249, %v419
      %v421 = vpop.f32.mrf.mxu0
      %v422 = vpop.f32.mrf.mxu0
      %v423 = vadd.f32 %v254, %v422
      %v424 = vpop.f32.mrf.mxu0
      %425 = vmatprep.mubr.bf16.mxu0 0
      %426 = vmatmul.mubr.bf16.gmra.mxu0 %v350
      %v427 = vpop.f32.mrf.mxu0
      %v428 = vadd.f32 %v259, %v427
      %v429 = vpop.f32.mrf.mxu0
      %v430 = vpop.f32.mrf.mxu0
      %v431 = vadd.f32 %v264, %v430
      %v432 = vpop.f32.mrf.mxu0
      %433 = vmatprep.mubr.bf16.mxu0 0
      %434 = vmatmul.mubr.bf16.gmra.mxu0 %v353
      %v435 = vpop.f32.mrf.mxu0
      %v436 = vadd.f32 %v269, %v435
      %v437 = vpop.f32.mrf.mxu0
      %v438 = vpop.f32.mrf.mxu0
      %v439 = vadd.f32 %v274, %v438
      %v440 = vpop.f32.mrf.mxu0
      %441 = vmatprep.mubr.bf16.mxu0 0
      %442 = vmatmul.mubr.bf16.gmra.mxu0 %v356
      %v443 = vpop.f32.mrf.mxu0
      %v444 = vadd.f32 %v279, %v443
      %v445 = vpop.f32.mrf.mxu0
      %v446 = vpop.f32.mrf.mxu0
      %v447 = vadd.f32 %v284, %v446
      %v448 = vpop.f32.mrf.mxu0
      %449 = vmatprep.mubr.bf16.mxu0 0
      %450 = vmatmul.mubr.bf16.gmra.mxu0 %v359
      %v451 = vpop.f32.mrf.mxu0
      %v452 = vadd.f32 %v289, %v451
      %v453 = vpop.f32.mrf.mxu0
      %v454 = vpop.f32.mrf.mxu0
      %v455 = vadd.f32 %v294, %v454
      %v456 = vpop.f32.mrf.mxu0
      %457 = vdwg.mxu0
      %v458 = vpack.c.bf16 %v399, %v396
      %v459 = vpack.c.bf16 %v407, %v404
      %v460 = vpack.c.bf16 %v415, %v412
      %v461 = vpack.c.bf16 %v423, %v420
      %v462 = vpack.c.bf16 %v431, %v428
      %v463 = vpack.c.bf16 %v439, %v436
      %v464 = vpack.c.bf16 %v447, %v444
      %v465 = vpack.c.bf16 %v455, %v452
      %v474 = vunpack.c.l.b16 %v458
      %v475 = vunpack.c.h.b16 %v458
      %v476 = vunpack.c.l.b16 %v459
      %v477 = vunpack.c.h.b16 %v459
      %v478 = vunpack.c.l.b16 %v460
      %v479 = vunpack.c.h.b16 %v460
      %v480 = vunpack.c.l.b16 %v461
      %v481 = vunpack.c.h.b16 %v461
      %v482 = vunpack.c.l.b16 %v462
      %v483 = vunpack.c.h.b16 %v462
      %v484 = vunpack.c.l.b16 %v463
      %v485 = vunpack.c.h.b16 %v463
      %v486 = vunpack.c.l.b16 %v464
      %v487 = vunpack.c.h.b16 %v464
      %v488 = vunpack.c.l.b16 %v465
      %v489 = vunpack.c.h.b16 %v465
      %v490 = vpack.c.b16 %v474, %v474
      %v491 = vpack.c.b16 %v475, %v475
      %v492 = vpack.c.b16 %v476, %v476
      %v493 = vpack.c.b16 %v477, %v477
      %v494 = vpack.c.b16 %v478, %v478
      %v495 = vpack.c.b16 %v479, %v479
      %v496 = vpack.c.b16 %v480, %v480
      %v497 = vpack.c.b16 %v481, %v481
      %v498 = vpack.c.b16 %v482, %v482
      %v499 = vpack.c.b16 %v483, %v483
      %v500 = vpack.c.b16 %v484, %v484
      %v501 = vpack.c.b16 %v485, %v485
      %v502 = vpack.c.b16 %v486, %v486
      %v503 = vpack.c.b16 %v487, %v487
      %v504 = vpack.c.b16 %v488, %v488
      %v505 = vpack.c.b16 %v489, %v489
      %vm522 = vcmask 257024
      %523 = vst.msk [vmem:[%s170] sm:$0xf] %vm522, %v490
      %524 = vst.msk [vmem:[%s170 + $0x4] sm:$0xf] %vm522, %v491
      %525 = vst.msk [vmem:[%s170 + $0x8] sm:$0xf] %vm522, %v492
      %526 = vst.msk [vmem:[%s170 + $0xc] sm:$0xf] %vm522, %v493
      %527 = vst.msk [vmem:[%s170 + $0x10] sm:$0xf] %vm522, %v494
      %528 = vst.msk [vmem:[%s170 + $0x14] sm:$0xf] %vm522, %v495
      %529 = vst.msk [vmem:[%s170 + $0x18] sm:$0xf] %vm522, %v496
      %530 = vst.msk [vmem:[%s170 + $0x1c] sm:$0xf] %vm522, %v497
      %531 = vst.msk [vmem:[%s170 + $0x20] sm:$0xf] %vm522, %v498
      %532 = vst.msk [vmem:[%s170 + $0x24] sm:$0xf] %vm522, %v499
      %533 = vst.msk [vmem:[%s170 + $0x28] sm:$0xf] %vm522, %v500
      %534 = vst.msk [vmem:[%s170 + $0x2c] sm:$0xf] %vm522, %v501
      %535 = vst.msk [vmem:[%s170 + $0x30] sm:$0xf] %vm522, %v502
      %536 = vst.msk [vmem:[%s170 + $0x34] sm:$0xf] %vm522, %v503
      %537 = vst.msk [vmem:[%s170 + $0x38] sm:$0xf] %vm522, %v504
      %538 = vst.msk [vmem:[%s170 + $0x3c] sm:$0xf] %vm522, %v505
      %p539 = scmp.lt.s32.totalorder %s14, 1
      %s540 = scalar_select %p539, %s14, 1
      %s541 = smul.addr %s540, 16
      %s542 = smul.addr %s541, 4
      %s543 = scalar_lea.vmem %s3, %s542
      // Predicated region
      $region33: #{tpu_custom_call.1} parent=31 // pred_check
        %p544 = pneg %p100
      $region34: #{tpu_custom_call.1} parent=31 // pred_check_branch
        %546 = sbr.rel (%p544) target = $region36
      $region35: #{tpu_custom_call.1} parent=31 // pred_region
        _
      $region36: #{tpu_custom_call.1} parent=31 // pred_fallthru
        _
    $region32: #{tpu_custom_call.1} parent=5 // pred_fallthru
      _
    %p547 = scmp.le.s32.totalorder 2, %s9
    // Predicated region
    $region37: #{tpu_custom_call.1} parent=5 // pred_check
      %p548 = pneg %p547
    $region38: #{tpu_custom_call.1} parent=5 // pred_check_branch
      %550 = sbr.rel (%p548) target = $region40
    $region39: #{tpu_custom_call.1} parent=5 // pred_region
      %s551 = ssub.s32 %s9, 2
      // Predicated region
      $region41: #{tpu_custom_call.1} parent=39 // pred_check
        %p552 = pneg %p106
      $region42: #{tpu_custom_call.1} parent=39 // pred_check_branch
        %554 = sbr.rel (%p552) target = $region44
      $region43: #{tpu_custom_call.1} parent=39 // pred_region
        %p555 = scmp.lt.s32.totalorder %s15, 1
        %s556 = scalar_select %p555, %s15, 1
        %s557 = smul.addr %s556, 16
        %s558 = smul.addr %s557, 4
        %s559 = scalar_lea.vmem %s3, %s558
      $region44: #{tpu_custom_call.1} parent=39 // pred_fallthru
        _
    $region40: #{tpu_custom_call.1} parent=5 // pred_fallthru
      _
  $region6: #{tpu_custom_call.1} parent=0 // loop_footer
    %s13 = sadd.s32 1, %s9
  $region7: #{tpu_custom_call.1} parent=0 // loop_footer_branch
    %8 = sbr.rel target = $region3
  $region8: #{tpu_custom_call.1} parent=0 // loop_exit
    _

</llo_original>
